<compile_context>
chip_gen: v5e
topology: v5e:2x2
jax: 0.10.0
libtpu: 0.0.40
codegen_flags: <defaults>
</compile_context>

<pallas_src>
import functools

import jax
import jax.numpy as jnp
from jax.experimental import pallas as pl
from jax.experimental.pallas import tpu as pltpu


# ---------------------------------------------------------------------------
# Kernels
# ---------------------------------------------------------------------------
def _reduce_kernel(*refs, op, acc_dtype):
    # refs = (x_0_ref, ..., x_{L-1}_ref, o_ref); each x_l_ref is a (TN, D) tile.
    x_refs, o_ref = refs[:-1], refs[-1]
    if op == "sum":
        acc = x_refs[0][...].astype(acc_dtype)
        for r in x_refs[1:]:
            acc = acc + r[...].astype(acc_dtype)
    else:  # "max"
        acc = x_refs[0][...]
        for r in x_refs[1:]:
            acc = jnp.maximum(acc, r[...])
    o_ref[...] = acc.astype(o_ref.dtype)


def _concat_kernel(*refs, offsets, widths):
    # refs = (x_0_ref, ..., x_{L-1}_ref, o_ref); o_ref is a (TN, sum(D_l))
    # output block; each input tile is stored into its column slab.  When all
    # widths (and hence offsets) are multiples of 128 these stores are
    # lane-dense unmasked vst; otherwise they fall back to masked stores
    # (unavoidable without changing the concat output layout).
    x_refs, o_ref = refs[:-1], refs[-1]
    for r, off, w in zip(x_refs, offsets, widths):
        o_ref[:, off:off + w] = r[...]


# ---------------------------------------------------------------------------
# VMEM budget / tiling helpers
# ---------------------------------------------------------------------------
@functools.lru_cache(maxsize=1)
def _vmem_params():
    """(working_set_budget_bytes, vmem_limit_bytes), generation-aware.

    ~45% of physical VMEM for the double-buffered working set (~56 MiB on
    128 MiB v5e/v6e parts, ~28 MiB on 64 MiB v7x), plus an explicit scoped
    VMEM limit with headroom so the computed tiles always fit.
    """
    cap = 64 * 1024 * 1024  # conservative fallback (v7x-sized)
    try:
        info = pltpu.get_tpu_info()
        cap_attr = getattr(info, "vmem_capacity_bytes", None)
        if cap_attr:
            cap = int(cap_attr)
    except Exception:
        pass
    budget = max(16 << 20, min(int(cap * 0.45), 56 << 20))
    limit = min(int(cap * 0.75), budget + (16 << 20))
    return budget, limit


def _tile_n(n, in_width, out_width, itemsize, budget):
    """Pick a row-tile TN and grid size over N.

    - Tiny N -> single full-dim block (always layout-legal, any N).
    - Otherwise: largest sublane-aligned TN that (a) fits the double-buffered
      working set in `budget`, (b) is <= 1024 rows, and (c) yields >= 2 grid
      steps so v7x's second TensorCore isn't idle.
    """
    if itemsize >= 4:
        sublane = 8
    elif itemsize == 2:
        sublane = 16
    else:
        sublane = 32

    # Double-buffered (inputs + output) bytes per row.
    per_row = 2 * (in_width + out_width) * itemsize

    if n < 2 * sublane:
        # Tiny N: the working set is negligible at these sizes; full-dim block.
        return n, 1

    # Largest sublane-aligned tile fitting the budget.
    fit_rows = (budget // max(per_row, 1)) // sublane * sublane
    fit_rows = max(sublane, fit_rows)

    # >= 2 grid steps: cap the tile at ceil(N/2) rounded up to a sublane multiple.
    half = -(-n // 2)
    half = -(-half // sublane) * sublane

    tn = max(sublane, min(fit_rows, 1024, half))
    return tn, pl.cdiv(n, tn)


def _as_2d(x):
    return x.reshape(1, -1) if x.ndim == 1 else x.reshape(-1, x.shape[-1])


# ---------------------------------------------------------------------------
# Wrappers
# ---------------------------------------------------------------------------
def _jk_reduce(xs, op):
    xs2d = [_as_2d(x) for x in xs]
    shape0 = xs[0].shape
    for x in xs:
        assert x.shape == shape0, "sum/max modes require identical shapes"
    L = len(xs2d)
    N, D = xs2d[0].shape
    dtype = xs2d[0].dtype
    itemsize = dtype.itemsize

    # Accumulate narrow floats in f32 and narrow ints in i32 (avoids the
    # per-layer rounding / overflow of accumulating in the input dtype).
    if op == "sum" and itemsize < 4 and jnp.issubdtype(dtype, jnp.floating):
        acc_dtype = jnp.float32
    elif op == "sum" and itemsize < 4 and jnp.issubdtype(dtype, jnp.integer):
        acc_dtype = jnp.int32
    else:
        acc_dtype = dtype

    budget, vmem_limit = _vmem_params()
    tn, gn = _tile_n(N, L * D, D, itemsize, budget)
    bytes_accessed = (L + 1) * N * D * itemsize

    out = pl.pallas_call(
        functools.partial(_reduce_kernel, op=op, acc_dtype=acc_dtype),
        out_shape=jax.ShapeDtypeStruct((N, D), dtype),
        grid=(gn,),
        in_specs=[pl.BlockSpec((tn, D), lambda i: (i, 0))] * L,
        out_specs=pl.BlockSpec((tn, D), lambda i: (i, 0)),
        compiler_params=pltpu.CompilerParams(
            dimension_semantics=("parallel",),
            vmem_limit_bytes=vmem_limit,
        ),
        cost_estimate=pl.CostEstimate(
            flops=(L - 1) * N * D, transcendentals=0, bytes_accessed=bytes_accessed
        ),
    )(*xs2d)
    return out.reshape(shape0)


def _jk_concat(xs):
    xs2d = [_as_2d(x) for x in xs]
    lead = xs[0].shape[:-1]
    for x in xs:
        assert x.shape[:-1] == lead, "concat mode requires identical leading dims"
    L = len(xs2d)
    N = xs2d[0].shape[0]
    dtype = xs2d[0].dtype
    itemsize = dtype.itemsize
    widths = tuple(int(x.shape[-1]) for x in xs2d)
    offsets = tuple(int(sum(widths[:l])) for l in range(L))
    total_w = int(sum(widths))

    budget, vmem_limit = _vmem_params()
    tn, gn = _tile_n(N, total_w, total_w, itemsize, budget)
    bytes_accessed = 2 * N * total_w * itemsize

    out = pl.pallas_call(
        functools.partial(_concat_kernel, offsets=offsets, widths=widths),
        out_shape=jax.ShapeDtypeStruct((N, total_w), dtype),
        grid=(gn,),
        in_specs=[pl.BlockSpec((tn, w), lambda i: (i, 0)) for w in widths],
        out_specs=pl.BlockSpec((tn, total_w), lambda i: (i, 0)),
        compiler_params=pltpu.CompilerParams(
            dimension_semantics=("parallel",),
            vmem_limit_bytes=vmem_limit,
        ),
        cost_estimate=pl.CostEstimate(
            flops=0, transcendentals=0, bytes_accessed=bytes_accessed
        ),
    )(*xs2d)
    return out.reshape(lead + (total_w,))


class JumpingKnowledge:
    """JAX/Pallas port of the PyTorch JumpingKnowledge module."""

    def __init__(self, mode):
        self.mode = mode.lower()
        assert self.mode in ["c", "s", "m", "l"]

    def __call__(self, xs):
        assert isinstance(xs, (list, tuple))
        if self.mode == "l":
            return xs[-1]  # identity, no kernel needed
        if self.mode == "c":
            return _jk_concat(list(xs))
        elif self.mode == "s":
            return _jk_reduce(list(xs), "sum")
        else:  # 'm'
            return _jk_reduce(list(xs), "max")

    def __repr__(self):
        return "{}({})".format(self.__class__.__name__, self.mode)


# ---------------------------------------------------------------------------
# Demo / self-test
# ---------------------------------------------------------------------------
if __name__ == "__main__":
    key = jax.random.PRNGKey(0)
    L, N, D = 4, 16, 128
    keys = jax.random.split(key, L)
    xs = [jax.random.normal(k, (N, D), dtype=jnp.float32) for k in keys]

    # mode 'c': concat along last dim
    out_c = jax.block_until_ready(JumpingKnowledge("c")(xs))
    ref_c = jnp.concatenate(xs, axis=-1)
    assert out_c.shape == (N, L * D)
    assert jnp.allclose(out_c, ref_c)

    # mode 's': elementwise sum
    out_s = jax.block_until_ready(JumpingKnowledge("s")(xs))
    ref_s = functools.reduce(lambda a, b: a + b, xs)
    assert out_s.shape == (N, D)
    assert jnp.allclose(out_s, ref_s, atol=1e-5)

    # mode 'm': elementwise max across layers
    out_m = jax.block_until_ready(JumpingKnowledge("m")(xs))
    ref_m = jnp.max(jnp.stack(xs, axis=-1), axis=-1)
    assert out_m.shape == (N, D)
    assert jnp.allclose(out_m, ref_m)

    # mode 'l': last layer (identity)
    out_l = jax.block_until_ready(JumpingKnowledge("l")(xs))
    assert jnp.allclose(out_l, xs[-1])

    # Unaligned small shapes (single full-dim block path, any N/D legal).
    keys2 = jax.random.split(jax.random.PRNGKey(1), 3)
    ys = [jax.random.normal(k, (10, 96), dtype=jnp.float32) for k in keys2]
    assert jnp.allclose(JumpingKnowledge("s")(ys), ys[0] + ys[1] + ys[2], atol=1e-5)
    assert jnp.allclose(JumpingKnowledge("c")(ys), jnp.concatenate(ys, axis=-1))

    # bf16 sum: f32 accumulation inside the kernel.
    zs = [x.astype(jnp.bfloat16) for x in xs]
    out_sb = jax.block_until_ready(JumpingKnowledge("s")(zs))
    ref_sb = sum(z.astype(jnp.float32) for z in zs).astype(jnp.bfloat16)
    assert out_sb.dtype == jnp.bfloat16
    assert jnp.allclose(out_sb.astype(jnp.float32), ref_sb.astype(jnp.float32),
                        atol=2e-2, rtol=2e-2)

    # Tiled path: N large enough for a multi-block grid over N (>=2 steps).
    N3 = 2048
    keys3 = jax.random.split(jax.random.PRNGKey(2), L)
    ws = [jax.random.normal(k, (N3, D), dtype=jnp.float32) for k in keys3]
    out_tm = jax.block_until_ready(JumpingKnowledge("m")(ws))
    assert jnp.allclose(out_tm, jnp.max(jnp.stack(ws, -1), -1))
    out_tc = jax.block_until_ready(JumpingKnowledge("c")(ws))
    assert jnp.allclose(out_tc, jnp.concatenate(ws, axis=-1))

    print("KERNEL_OK")
</pallas_src>

<mosaic_0001>
module attributes {stable_mosaic.version = 11 : i64} {
  func.func @_concat_kernel(%arg0: i32, %arg1: memref<8x128xf32, #tpu.memory_space<vmem>>, %arg2: memref<8x128xf32, #tpu.memory_space<vmem>>, %arg3: memref<8x128xf32, #tpu.memory_space<vmem>>, %arg4: memref<8x128xf32, #tpu.memory_space<vmem>>, %arg5: memref<8x512xf32, #tpu.memory_space<vmem>>) attributes {dimension_semantics = [#tpu.dimension_semantics<parallel>], iteration_bounds = array<i64: 2>, scalar_prefetch = 0 : i64, scratch_operands = 0 : i64, tpu.core_type = #tpu.core_type<tc>, window_params = [{transform_indices = @transform_0, window_bounds = array<i64: 8, 128>}, {transform_indices = @transform_1, window_bounds = array<i64: 8, 128>}, {transform_indices = @transform_2, window_bounds = array<i64: 8, 128>}, {transform_indices = @transform_3, window_bounds = array<i64: 8, 128>}, {transform_indices = @transform_4, window_bounds = array<i64: 8, 512>}]} {
    %c0 = arith.constant 0 : index
    %c0_0 = arith.constant 0 : index
    %0 = vector.load %arg1[%c0, %c0_0] : memref<8x128xf32, #tpu.memory_space<vmem>>, vector<8x128xf32>
    %c0_1 = arith.constant 0 : index
    %c0_2 = arith.constant 0 : index
    %1 = vector.load %arg5[%c0_1, %c0_2] : memref<8x512xf32, #tpu.memory_space<vmem>>, vector<8x128xf32>
    tpu.vector_store %arg5[%c0_1, %c0_2], %0 {strides = array<i32>} : memref<8x512xf32, #tpu.memory_space<vmem>>, vector<8x128xf32>,
    %c0_3 = arith.constant 0 : index
    %c0_4 = arith.constant 0 : index
    %2 = vector.load %arg2[%c0_3, %c0_4] : memref<8x128xf32, #tpu.memory_space<vmem>>, vector<8x128xf32>
    %c0_5 = arith.constant 0 : index
    %c128 = arith.constant 128 : index
    %3 = vector.load %arg5[%c0_5, %c128] : memref<8x512xf32, #tpu.memory_space<vmem>>, vector<8x128xf32>
    tpu.vector_store %arg5[%c0_5, %c128], %2 {strides = array<i32>} : memref<8x512xf32, #tpu.memory_space<vmem>>, vector<8x128xf32>,
    %c0_6 = arith.constant 0 : index
    %c0_7 = arith.constant 0 : index
    %4 = vector.load %arg3[%c0_6, %c0_7] : memref<8x128xf32, #tpu.memory_space<vmem>>, vector<8x128xf32>
    %c0_8 = arith.constant 0 : index
    %c256 = arith.constant 256 : index
    %5 = vector.load %arg5[%c0_8, %c256] : memref<8x512xf32, #tpu.memory_space<vmem>>, vector<8x128xf32>
    tpu.vector_store %arg5[%c0_8, %c256], %4 {strides = array<i32>} : memref<8x512xf32, #tpu.memory_space<vmem>>, vector<8x128xf32>,
    %c0_9 = arith.constant 0 : index
    %c0_10 = arith.constant 0 : index
    %6 = vector.load %arg4[%c0_9, %c0_10] : memref<8x128xf32, #tpu.memory_space<vmem>>, vector<8x128xf32>
    %c0_11 = arith.constant 0 : index
    %c384 = arith.constant 384 : index
    %7 = vector.load %arg5[%c0_11, %c384] : memref<8x512xf32, #tpu.memory_space<vmem>>, vector<8x128xf32>
    tpu.vector_store %arg5[%c0_11, %c384], %6 {strides = array<i32>} : memref<8x512xf32, #tpu.memory_space<vmem>>, vector<8x128xf32>,
    return
  }
  func.func @transform_0(%arg0: i32) -> (i32, i32) {
    %c0_i32 = arith.constant 0 : i32
    %c0_i32_0 = arith.constant 0 : i32
    return %arg0, %c0_i32 : i32, i32
  }
  func.func @transform_1(%arg0: i32) -> (i32, i32) {
    %c0_i32 = arith.constant 0 : i32
    %c0_i32_0 = arith.constant 0 : i32
    return %arg0, %c0_i32 : i32, i32
  }
  func.func @transform_2(%arg0: i32) -> (i32, i32) {
    %c0_i32 = arith.constant 0 : i32
    %c0_i32_0 = arith.constant 0 : i32
    return %arg0, %c0_i32 : i32, i32
  }
  func.func @transform_3(%arg0: i32) -> (i32, i32) {
    %c0_i32 = arith.constant 0 : i32
    %c0_i32_0 = arith.constant 0 : i32
    return %arg0, %c0_i32 : i32, i32
  }
  func.func @transform_4(%arg0: i32) -> (i32, i32) {
    %c0_i32 = arith.constant 0 : i32
    %c0_i32_0 = arith.constant 0 : i32
    return %arg0, %c0_i32 : i32, i32
  }
}

</mosaic_0001>

<llo_original>
// kernel: tpu_custom_call.1
$region0: #{tpu_custom_call.1}
  #allocation0 [shape = 'u32[]', space=smem, size = 0x4, offset = 0x4, fixed_abs, tag = 'smem constant byte address 0x4 - core index']
  #allocation1 [shape = 'u32[72,128]{1,0:T(1,128)}', space=vmem, size = 0x9000, scoped, tag = 'internal scratch']
  %s0 = inlined_call_operand.hbm [shape: f32[16,128], index: 0, kind: input, shape index: {}]
  %s1 = inlined_call_operand.hbm [shape: f32[16,128], index: 1, kind: input, shape index: {}]
  %s2 = inlined_call_operand.hbm [shape: f32[16,128], index: 2, kind: input, shape index: {}]
  %s3 = inlined_call_operand.hbm [shape: f32[16,128], index: 3, kind: input, shape index: {}]
  %s4 = inlined_call_operand.hbm [shape: f32[16,512], index: 4, kind: output, shape index: {}]
  %s5 = sld [smem:[#allocation0]]
  $region65: #{tpu_custom_call.1} parent=0
    _
  %s7 = ssub.s32 1, %s5
  %s8 = scalar_select 0, %s7, %s5
  $region1: #{tpu_custom_call.1} parent=0
    #allocation2 [shape = 'u8[8192]{0}', space=vmem, size = 0x2000, scoped, tag = 'input window, operand 0']
    #allocation3 [shape = 's32[2]{0}', space=sflag, size = 0x8, scoped, tag = 'scoped memory for tpu_custom_call.1']
    #allocation4 [shape = 's32[2]{0}', space=sflag, size = 0x8, scoped, tag = 'scoped memory for tpu_custom_call.1']
    #allocation5 [shape = 'u8[8192]{0}', space=vmem, size = 0x2000, scoped, tag = 'input window, operand 1']
    #allocation6 [shape = 's32[2]{0}', space=sflag, size = 0x8, scoped, tag = 'scoped memory for tpu_custom_call.1']
    #allocation7 [shape = 'u8[8192]{0}', space=vmem, size = 0x2000, scoped, tag = 'input window, operand 2']
    #allocation8 [shape = 'u8[8192]{0}', space=vmem, size = 0x2000, scoped, tag = 'input window, operand 3']
    #allocation9 [shape = 's32[2]{0}', space=sflag, size = 0x8, scoped, tag = 'scoped memory for tpu_custom_call.1']
    #allocation10 [shape = 'u8[32768]{0}', space=vmem, size = 0x8000, scoped, tag = 'output window, operand 0']
    %9 = vsyncpa [#allocation3], 0
    %s10 = scalar_lea.sflag [#allocation3], 1
    %11 = vsyncpa %s10, 0
    %12 = vsyncpa [#allocation6], 0
    %s13 = scalar_lea.sflag [#allocation6], 1
    %14 = vsyncpa %s13, 0
    %15 = vsyncpa [#allocation9], 0
    %s16 = scalar_lea.sflag [#allocation9], 1
    %17 = vsyncpa %s16, 0
    %18 = vsyncpa [#allocation4], 0
    %s19 = scalar_lea.sflag [#allocation4], 1
    %20 = vsyncpa %s19, 0
    loop: start=0, step=1, limit=4
    $region2: #{tpu_custom_call.1} parent=1 // loop_pre_header
      _
    $region3: #{tpu_custom_call.1} parent=1 // loop_header
      %s22 = sphi 0, %s26
      %p23 = scmp.ge.s32.totalorder %s22, 4
      %s32 = sphi 0, %s34
      %s35 = sphi 0, %s32
      %s36 = sphi 0, %s35
      %s52 = sphi 0, %s36
      %s58 = sphi 0, %s60
      %s61 = sphi 0, %s58
      %s62 = sphi 0, %s61
      %s78 = sphi 0, %s62
      %s84 = sphi 0, %s86
      %s87 = sphi 0, %s84
      %s88 = sphi 0, %s87
      %s104 = sphi 0, %s88
      %s110 = sphi 0, %s112
      %s113 = sphi 0, %s110
      %s114 = sphi 0, %s113
      %s130 = sphi 0, %s114
      %s136 = sphi 0, %s138
      %s139 = sphi 0, %s136
      %s140 = sphi 0, %s139
      %s156 = sphi 0, %s140
    $region4: #{tpu_custom_call.1} parent=1 // loop_header_branch
      %25 = sbr.rel (%p23) target = $region8
    $region5: #{tpu_custom_call.1} parent=1 // loop_body
      %s27 = ssub.s32 %s22, 1
      %s28 = ssub.s32 %s22, 2
      %s29 = sadd.s32 %s22, 1
      %s30 = ssub.s32 %s22, %s29
      %p31 = scmp.eq.s32.totalorder %s30, 0
      %s33 = sadd.s32 %s32, 1
      %s34 = scalar_select %p31, %s32, %s33
      %p37 = pneg %p31
      %p38 = scmp.eq.s32.totalorder %s22, 1
      %p39 = por %p37, %p38
      %p40 = scmp.ne.s32.totalorder %s32, %s35
      %p41 = scmp.eq.s32.totalorder %s22, 0
      %p42 = por %p40, %p41
      %p43 = scmp.ne.s32.totalorder %s32, %s35
      %p44 = scmp.eq.s32.totalorder %s27, 1
      %p45 = por %p43, %p44
      %p46 = scmp.ne.s32.totalorder %s35, %s36
      %p47 = scmp.eq.s32.totalorder %s27, 0
      %p48 = por %p46, %p47
      %p49 = scmp.ne.s32.totalorder %s35, %s36
      %p50 = scmp.eq.s32.totalorder %s28, 1
      %p51 = por %p49, %p50
      %p53 = scmp.ne.s32.totalorder %s36, %s52
      %p54 = scmp.eq.s32.totalorder %s28, 0
      %p55 = por %p53, %p54
      %s56 = ssub.s32 %s22, %s29
      %p57 = scmp.eq.s32.totalorder %s56, 0
      %s59 = sadd.s32 %s58, 1
      %s60 = scalar_select %p57, %s58, %s59
      %p63 = pneg %p57
      %p64 = scmp.eq.s32.totalorder %s22, 1
      %p65 = por %p63, %p64
      %p66 = scmp.ne.s32.totalorder %s58, %s61
      %p67 = scmp.eq.s32.totalorder %s22, 0
      %p68 = por %p66, %p67
      %p69 = scmp.ne.s32.totalorder %s58, %s61
      %p70 = scmp.eq.s32.totalorder %s27, 1
      %p71 = por %p69, %p70
      %p72 = scmp.ne.s32.totalorder %s61, %s62
      %p73 = scmp.eq.s32.totalorder %s27, 0
      %p74 = por %p72, %p73
      %p75 = scmp.ne.s32.totalorder %s61, %s62
      %p76 = scmp.eq.s32.totalorder %s28, 1
      %p77 = por %p75, %p76
      %p79 = scmp.ne.s32.totalorder %s62, %s78
      %p80 = scmp.eq.s32.totalorder %s28, 0
      %p81 = por %p79, %p80
      %s82 = ssub.s32 %s22, %s29
      %p83 = scmp.eq.s32.totalorder %s82, 0
      %s85 = sadd.s32 %s84, 1
      %s86 = scalar_select %p83, %s84, %s85
      %p89 = pneg %p83
      %p90 = scmp.eq.s32.totalorder %s22, 1
      %p91 = por %p89, %p90
      %p92 = scmp.ne.s32.totalorder %s84, %s87
      %p93 = scmp.eq.s32.totalorder %s22, 0
      %p94 = por %p92, %p93
      %p95 = scmp.ne.s32.totalorder %s84, %s87
      %p96 = scmp.eq.s32.totalorder %s27, 1
      %p97 = por %p95, %p96
      %p98 = scmp.ne.s32.totalorder %s87, %s88
      %p99 = scmp.eq.s32.totalorder %s27, 0
      %p100 = por %p98, %p99
      %p101 = scmp.ne.s32.totalorder %s87, %s88
      %p102 = scmp.eq.s32.totalorder %s28, 1
      %p103 = por %p101, %p102
      %p105 = scmp.ne.s32.totalorder %s88, %s104
      %p106 = scmp.eq.s32.totalorder %s28, 0
      %p107 = por %p105, %p106
      %s108 = ssub.s32 %s22, %s29
      %p109 = scmp.eq.s32.totalorder %s108, 0
      %s111 = sadd.s32 %s110, 1
      %s112 = scalar_select %p109, %s110, %s111
      %p115 = pneg %p109
      %p116 = scmp.eq.s32.totalorder %s22, 1
      %p117 = por %p115, %p116
      %p118 = scmp.ne.s32.totalorder %s110, %s113
      %p119 = scmp.eq.s32.totalorder %s22, 0
      %p120 = por %p118, %p119
      %p121 = scmp.ne.s32.totalorder %s110, %s113
      %p122 = scmp.eq.s32.totalorder %s27, 1
      %p123 = por %p121, %p122
      %p124 = scmp.ne.s32.totalorder %s113, %s114
      %p125 = scmp.eq.s32.totalorder %s27, 0
      %p126 = por %p124, %p125
      %p127 = scmp.ne.s32.totalorder %s113, %s114
      %p128 = scmp.eq.s32.totalorder %s28, 1
      %p129 = por %p127, %p128
      %p131 = scmp.ne.s32.totalorder %s114, %s130
      %p132 = scmp.eq.s32.totalorder %s28, 0
      %p133 = por %p131, %p132
      %s134 = ssub.s32 %s22, %s29
      %p135 = scmp.eq.s32.totalorder %s134, 0
      %s137 = sadd.s32 %s136, 1
      %s138 = scalar_select %p135, %s136, %s137
      %p141 = pneg %p135
      %p142 = scmp.eq.s32.totalorder %s22, 1
      %p143 = por %p141, %p142
      %p144 = scmp.ne.s32.totalorder %s136, %s139
      %p145 = scmp.eq.s32.totalorder %s22, 0
      %p146 = por %p144, %p145
      %p147 = scmp.ne.s32.totalorder %s136, %s139
      %p148 = scmp.eq.s32.totalorder %s27, 1
      %p149 = por %p147, %p148
      %p150 = scmp.ne.s32.totalorder %s139, %s140
      %p151 = scmp.eq.s32.totalorder %s27, 0
      %p152 = por %p150, %p151
      %p153 = scmp.ne.s32.totalorder %s139, %s140
      %p154 = scmp.eq.s32.totalorder %s28, 1
      %p155 = por %p153, %p154
      %p157 = scmp.ne.s32.totalorder %s140, %s156
      %p158 = scmp.eq.s32.totalorder %s28, 0
      %p159 = por %p157, %p158
      %p160 = scmp.le.s32.totalorder 1, %s22
      %p161 = scmp.lt.s32.totalorder %s22, 3
      %p162 = pnand %p160, %p161
      %p163 = pneg %p162
      // Predicated region
      $region9: #{tpu_custom_call.1} parent=5 // pred_check
        _
      $region10: #{tpu_custom_call.1} parent=5 // pred_check_branch
        %165 = sbr.rel (%p162) target = $region12
      $region11: #{tpu_custom_call.1} parent=5 // pred_region
        %s166 = ssub.s32 %s22, 1
      $region12: #{tpu_custom_call.1} parent=5 // pred_fallthru
        _
      %p167 = scmp.lt.s32.totalorder %s22, 2
      // Predicated region
      $region13: #{tpu_custom_call.1} parent=5 // pred_check
        %p168 = pneg %p167
      $region14: #{tpu_custom_call.1} parent=5 // pred_check_branch
        %170 = sbr.rel (%p168) target = $region16
      $region15: #{tpu_custom_call.1} parent=5 // pred_region
        // Predicated region
        $region17: #{tpu_custom_call.1} parent=15 // pred_check
          %p171 = pneg %p42
        $region18: #{tpu_custom_call.1} parent=15 // pred_check_branch
          %173 = sbr.rel (%p171) target = $region20
        $region19: #{tpu_custom_call.1} parent=15 // pred_region
          %s174 = sand.u32 %s32, 1
          %s175 = scalar_lea.sflag [#allocation3], %s174
          %s176 = sand.u32 %s32, 1
          %s177 = smul.addr %s176, 8
          %s178 = scalar_lea.vmem [#allocation2], %s177
          %180 = vsyncadd %s175, 0
          %s181 = smul.addr %s22, 8
          %s182 = scalar_lea.hbm %s0, %s181
          %s184 = sshll.u32 %s182, 4
          %s185 = int_to_ptr.hbm [resolvable:$true] %s184
          %s186 = sshll.u32 %s178, 4
          %s187 = int_to_ptr.vmem [resolvable:$true] %s186
          %189 = dma.hbm_to_vmem [thread:$0]  %s185, 128, %s187, %s175
        $region20: #{tpu_custom_call.1} parent=15 // pred_fallthru
          _
        // Predicated region
        $region21: #{tpu_custom_call.1} parent=15 // pred_check
          %p190 = pneg %p68
        $region22: #{tpu_custom_call.1} parent=15 // pred_check_branch
          %192 = sbr.rel (%p190) target = $region24
        $region23: #{tpu_custom_call.1} parent=15 // pred_region
          %s193 = sand.u32 %s22, 1
          %s194 = scalar_lea.sflag [#allocation6], %s193
          %s195 = sand.u32 %s58, 1
          %s196 = smul.addr %s195, 8
          %s197 = scalar_lea.vmem [#allocation5], %s196
          %199 = vsyncadd %s194, 0
          %s200 = smul.addr %s22, 8
          %s201 = scalar_lea.hbm %s1, %s200
          %s203 = sshll.u32 %s201, 4
          %s204 = int_to_ptr.hbm [resolvable:$true] %s203
          %s205 = sshll.u32 %s197, 4
          %s206 = int_to_ptr.vmem [resolvable:$true] %s205
          %208 = dma.hbm_to_vmem [thread:$0]  %s204, 128, %s206, %s194
        $region24: #{tpu_custom_call.1} parent=15 // pred_fallthru
          _
        // Predicated region
        $region25: #{tpu_custom_call.1} parent=15 // pred_check
          %p209 = pneg %p94
        $region26: #{tpu_custom_call.1} parent=15 // pred_check_branch
          %211 = sbr.rel (%p209) target = $region28
        $region27: #{tpu_custom_call.1} parent=15 // pred_region
          %s212 = sand.u32 %s22, 1
          %s213 = scalar_lea.sflag [#allocation6], %s212
          %s214 = sand.u32 %s84, 1
          %s215 = smul.addr %s214, 8
          %s216 = scalar_lea.vmem [#allocation7], %s215
          %218 = vsyncadd %s213, 0
          %s219 = smul.addr %s22, 8
          %s220 = scalar_lea.hbm %s2, %s219
          %s222 = sshll.u32 %s220, 4
          %s223 = int_to_ptr.hbm [resolvable:$true] %s222
          %s224 = sshll.u32 %s216, 4
          %s225 = int_to_ptr.vmem [resolvable:$true] %s224
          %227 = dma.hbm_to_vmem [thread:$0]  %s223, 128, %s225, %s213
        $region28: #{tpu_custom_call.1} parent=15 // pred_fallthru
          _
        // Predicated region
        $region29: #{tpu_custom_call.1} parent=15 // pred_check
          %p228 = pneg %p120
        $region30: #{tpu_custom_call.1} parent=15 // pred_check_branch
          %230 = sbr.rel (%p228) target = $region32
        $region31: #{tpu_custom_call.1} parent=15 // pred_region
          %s231 = sand.u32 %s110, 1
          %s232 = scalar_lea.sflag [#allocation9], %s231
          %s233 = sand.u32 %s110, 1
          %s234 = smul.addr %s233, 8
          %s235 = scalar_lea.vmem [#allocation8], %s234
          %237 = vsyncadd %s232, 0
          %s238 = smul.addr %s22, 8
          %s239 = scalar_lea.hbm %s3, %s238
          %s241 = sshll.u32 %s239, 4
          %s242 = int_to_ptr.hbm [resolvable:$true] %s241
          %s243 = sshll.u32 %s235, 4
          %s244 = int_to_ptr.vmem [resolvable:$true] %s243
          %246 = dma.hbm_to_vmem [thread:$0]  %s242, 128, %s244, %s232
        $region32: #{tpu_custom_call.1} parent=15 // pred_fallthru
          _
      $region16: #{tpu_custom_call.1} parent=5 // pred_fallthru
        _
      %p247 = scmp.le.s32.totalorder 1, %s22
      %p248 = scmp.lt.s32.totalorder %s22, 3
      %p249 = pnand %p247, %p248
      %p250 = pneg %p249
      // Predicated region
      $region33: #{tpu_custom_call.1} parent=5 // pred_check
        _
      $region34: #{tpu_custom_call.1} parent=5 // pred_check_branch
        %252 = sbr.rel (%p249) target = $region36
      $region35: #{tpu_custom_call.1} parent=5 // pred_region
        %s253 = ssub.s32 %s22, 1
        %s254 = sand.u32 %s35, 1
        %s255 = scalar_lea.sflag [#allocation3], %s254
        %s256 = sand.u32 %s35, 1
        %s257 = smul.addr %s256, 8
        %s258 = scalar_lea.vmem [#allocation2], %s257
        // Predicated region
        $region37: #{tpu_custom_call.1} parent=35 // pred_check
          %p259 = pneg %p48
        $region38: #{tpu_custom_call.1} parent=35 // pred_check_branch
          %261 = sbr.rel (%p259) target = $region40
        $region39: #{tpu_custom_call.1} parent=35 // pred_region
          %263 = dma.done %s255, 128
        $region40: #{tpu_custom_call.1} parent=35 // pred_fallthru
          _
        %s264 = sand.u32 %s27, 1
        %s265 = scalar_lea.sflag [#allocation6], %s264
        %s266 = sand.u32 %s61, 1
        %s267 = smul.addr %s266, 8
        %s268 = scalar_lea.vmem [#allocation5], %s267
        // Predicated region
        $region41: #{tpu_custom_call.1} parent=35 // pred_check
          %p269 = pneg %p74
        $region42: #{tpu_custom_call.1} parent=35 // pred_check_branch
          %271 = sbr.rel (%p269) target = $region44
        $region43: #{tpu_custom_call.1} parent=35 // pred_region
          %273 = dma.done %s265, 128
        $region44: #{tpu_custom_call.1} parent=35 // pred_fallthru
          _
        %s274 = sand.u32 %s27, 1
        %s275 = scalar_lea.sflag [#allocation6], %s274
        %s276 = sand.u32 %s87, 1
        %s277 = smul.addr %s276, 8
        %s278 = scalar_lea.vmem [#allocation7], %s277
        // Predicated region
        $region45: #{tpu_custom_call.1} parent=35 // pred_check
          %p279 = pneg %p100
        $region46: #{tpu_custom_call.1} parent=35 // pred_check_branch
          %281 = sbr.rel (%p279) target = $region48
        $region47: #{tpu_custom_call.1} parent=35 // pred_region
          %283 = dma.done %s275, 128
        $region48: #{tpu_custom_call.1} parent=35 // pred_fallthru
          _
        %s284 = sand.u32 %s113, 1
        %s285 = scalar_lea.sflag [#allocation9], %s284
        %s286 = sand.u32 %s113, 1
        %s287 = smul.addr %s286, 8
        %s288 = scalar_lea.vmem [#allocation8], %s287
        // Predicated region
        $region49: #{tpu_custom_call.1} parent=35 // pred_check
          %p289 = pneg %p126
        $region50: #{tpu_custom_call.1} parent=35 // pred_check_branch
          %291 = sbr.rel (%p289) target = $region52
        $region51: #{tpu_custom_call.1} parent=35 // pred_region
          %293 = dma.done %s285, 128
        $region52: #{tpu_custom_call.1} parent=35 // pred_fallthru
          _
        %s294 = sand.u32 %s35, 1
        %s295 = scalar_lea.sflag [#allocation3], %s294
        %s296 = sand.u32 %s35, 1
        %s297 = smul.addr %s296, 8
        %s298 = scalar_lea.vmem [#allocation2], %s297
        %p299 = pneg %p48
        %p300 = pneg %p45
        %s301 = sand.u32 %s27, 1
        %s302 = scalar_lea.sflag [#allocation6], %s301
        %s303 = sand.u32 %s61, 1
        %s304 = smul.addr %s303, 8
        %s305 = scalar_lea.vmem [#allocation5], %s304
        %p306 = pneg %p74
        %p307 = pneg %p71
        %s308 = sand.u32 %s27, 1
        %s309 = scalar_lea.sflag [#allocation6], %s308
        %s310 = sand.u32 %s87, 1
        %s311 = smul.addr %s310, 8
        %s312 = scalar_lea.vmem [#allocation7], %s311
        %p313 = pneg %p100
        %p314 = pneg %p97
        %s315 = sand.u32 %s113, 1
        %s316 = scalar_lea.sflag [#allocation9], %s315
        %s317 = sand.u32 %s113, 1
        %s318 = smul.addr %s317, 8
        %s319 = scalar_lea.vmem [#allocation8], %s318
        %p320 = pneg %p126
        %p321 = pneg %p123
        %p322 = pneg %p152
        %p323 = pneg %p149
        %s324 = sand.u32 %s139, 1
        %s325 = scalar_lea.sflag [#allocation4], %s324
        %s326 = sand.u32 %s139, 1
        %s327 = smul.addr %s326, 32
        %s328 = scalar_lea.vmem [#allocation10], %s327
        %v329 = vld [vmem:[%s258] sm:$0xff]
        %330 = vst [vmem:[%s328] sm:$0xff] %v329
        %v331 = vld [vmem:[%s268] sm:$0xff]
        %332 = vst [vmem:[%s328 + $0x8] sm:$0xff] %v331
        %v333 = vld [vmem:[%s278] sm:$0xff]
        %334 = vst [vmem:[%s328 + $0x10] sm:$0xff] %v333
        %v335 = vld [vmem:[%s288] sm:$0xff]
        %336 = vst [vmem:[%s328 + $0x18] sm:$0xff] %v335
        %s337 = sand.u32 %s139, 1
        %s338 = scalar_lea.sflag [#allocation4], %s337
        %s339 = sand.u32 %s139, 1
        %s340 = smul.addr %s339, 32
        %s341 = scalar_lea.vmem [#allocation10], %s340
        // Predicated region
        $region53: #{tpu_custom_call.1} parent=35 // pred_check
          %p342 = pneg %p149
        $region54: #{tpu_custom_call.1} parent=35 // pred_check_branch
          %344 = sbr.rel (%p342) target = $region56
        $region55: #{tpu_custom_call.1} parent=35 // pred_region
          %346 = vsyncadd %s338, 0
          %s347 = smul.addr %s27, 4
          %s348 = smul.addr %s347, 8
          %s349 = scalar_lea.hbm %s4, %s348
          %s351 = sshll.u32 %s341, 4
          %s352 = int_to_ptr.vmem [resolvable:$true] %s351
          %s353 = sshll.u32 %s349, 4
          %s354 = int_to_ptr.hbm [resolvable:$true] %s353
          %356 = dma.vmem_to_hbm [thread:$0]  %s352, 512, %s354, %s338
        $region56: #{tpu_custom_call.1} parent=35 // pred_fallthru
          _
      $region36: #{tpu_custom_call.1} parent=5 // pred_fallthru
        _
      %p357 = scmp.le.s32.totalorder 2, %s22
      // Predicated region
      $region57: #{tpu_custom_call.1} parent=5 // pred_check
        %p358 = pneg %p357
      $region58: #{tpu_custom_call.1} parent=5 // pred_check_branch
        %360 = sbr.rel (%p358) target = $region60
      $region59: #{tpu_custom_call.1} parent=5 // pred_region
        %s361 = ssub.s32 %s22, 2
        // Predicated region
        $region61: #{tpu_custom_call.1} parent=59 // pred_check
          %p362 = pneg %p155
        $region62: #{tpu_custom_call.1} parent=59 // pred_check_branch
          %364 = sbr.rel (%p362) target = $region64
        $region63: #{tpu_custom_call.1} parent=59 // pred_region
          %s365 = sand.u32 %s140, 1
          %s366 = scalar_lea.sflag [#allocation4], %s365
          %s367 = sand.u32 %s140, 1
          %s368 = smul.addr %s367, 32
          %s369 = scalar_lea.vmem [#allocation10], %s368
          %371 = dma.done %s366, 512
        $region64: #{tpu_custom_call.1} parent=59 // pred_fallthru
          _
      $region60: #{tpu_custom_call.1} parent=5 // pred_fallthru
        _
    $region6: #{tpu_custom_call.1} parent=1 // loop_footer
      %s26 = sadd.s32 1, %s22
    $region7: #{tpu_custom_call.1} parent=1 // loop_footer_branch
      %21 = sbr.rel target = $region3
    $region8: #{tpu_custom_call.1} parent=1 // loop_exit
      _
    %372 = vsyncpa [#allocation3], 1
    %s373 = scalar_lea.sflag [#allocation3], 1
    %374 = vsyncpa %s373, 1
    %375 = vsyncpa [#allocation6], 1
    %s376 = scalar_lea.sflag [#allocation6], 1
    %377 = vsyncpa %s376, 1
    %378 = vsyncpa [#allocation9], 1
    %s379 = scalar_lea.sflag [#allocation9], 1
    %380 = vsyncpa %s379, 1
    %381 = vsyncpa [#allocation4], 1
    %s382 = scalar_lea.sflag [#allocation4], 1
    %383 = vsyncpa %s382, 1

</llo_original>
